<compile_context>
chip_gen: v5e
topology: v5e:2x2
jax: 0.10.0
libtpu: 0.0.40
codegen_flags: <defaults>
</compile_context>

<pallas_src>
import jax
import jax.numpy as jnp
from jax.experimental import pallas as pl
from jax.experimental.pallas import tpu as pltpu


def _round_up(v, m):
    return -(-v // m) * m


def _attention_kernel(bidx_ref,   # (1, TN)    int32  repertoire id per row (lanes)
                      x_ref,      # (TN, D)    bf16   feature rows
                      w1_ref,     # (D, A)     bf16
                      b1_ref,     # (1, A)     f32
                      w2_ref,     # (A, 1)     f32
                      out_ref,    # (R_pad, D) f32    resident accumulator / output
                      l_ref):     # (R_pad, 1) f32    softmax denominators
    t = pl.program_id(0)

    @pl.when(t == 0)
    def _init():
        out_ref[...] = jnp.zeros_like(out_ref)
        l_ref[...] = jnp.zeros_like(l_ref)

    x = x_ref[...]                                                   # (TN, D) bf16

    # ---- attention scores for this row tile (computed exactly once) --------
    h = jnp.tanh(jnp.dot(x, w1_ref[...],
                         preferred_element_type=jnp.float32) + b1_ref[...])   # (TN, A)
    # Second projection keeps A as the contraction dim (no transpose of h).
    s = jnp.dot(h, w2_ref[...], preferred_element_type=jnp.float32)           # (TN, 1)

    # b2 is dropped: softmax over rows is shift-invariant (output_dim == 1).
    # Static shift: tanh in [-1, 1] => |s| <= sum|w2|, so exp(s - shift) is in
    # (0, 1] and can never overflow -> no -inf sentinel / running max needed.
    shift = jnp.sum(jnp.abs(w2_ref[...]), axis=0, keepdims=True)              # (1, 1)
    p = jnp.exp(s - shift)                                                    # (TN, 1)

    # ---- one-hot repertoire membership (only (R_pad, TN)-sized op) ----------
    rep_iota = jax.lax.broadcasted_iota(jnp.int32, (out_ref.shape[0], 1), 0)
    mask = (bidx_ref[...] == rep_iota).astype(jnp.bfloat16)                   # (R_pad, TN)
    # Padded rows carry id -1 (match nothing); ids >= R are silently ignored.

    # ---- scatter-accumulate on the MXU --------------------------------------
    px = (p * x).astype(jnp.bfloat16)                                         # (TN, D)
    out_ref[...] += jnp.dot(mask, px, preferred_element_type=jnp.float32)
    # Denominators: per-repertoire row-sums of p with the same mask.
    # TODO(synk): when D % 128 != 0 this could be folded into the lane padding
    # of the scatter above (append p as an extra x column) to delete this dot.
    l_ref[...] += jnp.dot(mask, p.astype(jnp.bfloat16),
                          preferred_element_type=jnp.float32)

    @pl.when(t == pl.num_programs(0) - 1)
    def _finalize():
        l = l_ref[...]
        inv = jnp.where(l > 0.0, pl.reciprocal(l, approx=False), 0.0)
        out_ref[...] = out_ref[...] * inv


def attention_layer_forward(x, batch_index, params, num_repertoires, *, tile_n=None):
    """x: (N, D) float; batch_index: (N,) ints with ids in [0, num_repertoires).

    Returns (num_repertoires, D) float32. Repertoires with no rows yield 0.
    """
    N, D = x.shape
    w1, b1, w2, b2 = params
    A = w1.shape[1]
    # Dropping b2 / using a static softmax shift is only valid for a single
    # attention score per row.
    assert w2.shape[1] == 1, "AttentionLayer kernel requires output_dim == 1"
    del b2
    assert batch_index.shape == (N,)
    R = int(num_repertoires)
    r_pad = _round_up(max(R, 1), 8)
    # TODO(synk): for very large R, loop repertoire sub-blocks inside the kernel
    # to bound the (r_pad, tn) mask and the resident (r_pad, D) accumulator.

    d_lanes = _round_up(D, 128)

    # Row-tile size: biggest tile that keeps the double-buffered bf16 x stream
    # near ~8 MiB and the (r_pad, tn) one-hot mask <= ~128K elements, so the
    # kernel stays HBM/MXU-bound (not spill-bound) and fits v7x's 64 MiB VMEM
    # as well as v5e's 16 MiB default scoped limit.
    if tile_n is None:
        tn = min(2048, max(128, ((8 << 20) // (4 * d_lanes)) // 128 * 128))
    else:
        tn = _round_up(max(int(tile_n), 128), 128)
    tn = min(tn, max(128, ((1 << 17) // r_pad) // 128 * 128))
    tn = min(tn, _round_up(N, 128))          # small N: collapse to a single tile
    num_tiles = pl.cdiv(N, tn)
    n_pad = num_tiles * tn

    # bf16 stream for x / W1 (matmul operands); all accumulation in-kernel is f32.
    x_p = jnp.pad(x.astype(jnp.bfloat16), ((0, n_pad - N), (0, 0)))
    bidx_row = jnp.pad(batch_index.astype(jnp.int32).reshape(1, N),
                       ((0, 0), (0, n_pad - N)), constant_values=-1)
    w1_c = w1.astype(jnp.bfloat16).reshape(D, A)
    b1_c = b1.astype(jnp.float32).reshape(1, A)
    w2_c = w2.astype(jnp.float32).reshape(A, 1)

    # Explicit VMEM budget (x double-buffer + per-tile intermediates + resident
    # output), clamped to be valid on v7x (64 MiB physical) and v5e/v6e.
    est = (4 * tn * d_lanes          # x double-buffer (bf16)
           + 12 * tn * d_lanes       # p*x intermediates (f32 + bf16 copies)
           + 8 * r_pad * tn          # one-hot mask intermediates
           + 4 * r_pad * d_lanes     # resident f32 output accumulator
           + (1 << 20))              # weights, batch-index row, misc
    vmem_limit = int(min(max(2 * est, 16 << 20), 48 << 20))

    grid_spec = pltpu.PrefetchScalarGridSpec(
        num_scalar_prefetch=0,
        grid=(num_tiles,),
        in_specs=[
            pl.BlockSpec((1, tn), lambda t: (0, t)),    # batch index (lane-major row)
            pl.BlockSpec((tn, D), lambda t: (t, 0)),    # x rows (pipelined)
            # Weights / bias stay resident (constant index maps).
            # TODO(synk): single-buffer these (pipeline_mode=pl.Buffered(1)); the
            # double-buffer waste is only D*A*2 (+A*4) bytes.
            pl.BlockSpec((D, A), lambda t: (0, 0)),     # W1 (bf16)
            pl.BlockSpec((1, A), lambda t: (0, 0)),     # b1 (f32)
            pl.BlockSpec((A, 1), lambda t: (0, 0)),     # w2 (f32)
        ],
        out_specs=pl.BlockSpec((r_pad, D), lambda t: (0, 0)),
        scratch_shapes=[pltpu.VMEM((r_pad, 1), jnp.float32)],
    )

    # TODO(synk): on v7x the single sequential grid axis leaves the second
    # TensorCore idle; splitting the row-tile axis into two partial (out, l)
    # sets plus a tiny JAX-side combine would give up to ~2x there.
    out = pl.pallas_call(
        _attention_kernel,
        out_shape=jax.ShapeDtypeStruct((r_pad, D), jnp.float32),
        grid_spec=grid_spec,
        compiler_params=pltpu.CompilerParams(
            dimension_semantics=("arbitrary",),
            vmem_limit_bytes=vmem_limit),
    )(bidx_row, x_p, w1_c, b1_c, w2_c)
    return out[:R]


def init_params(key, input_dim, attention_dim, output_dim):
    k1, k2, k3, k4 = jax.random.split(key, 4)
    w1 = jax.random.normal(k1, (input_dim, attention_dim), jnp.float32) * 0.1
    b1 = jax.random.normal(k2, (1, attention_dim), jnp.float32) * 0.1
    w2 = jax.random.normal(k3, (attention_dim, output_dim), jnp.float32) * 0.1
    b2 = jax.random.normal(k4, (1, output_dim), jnp.float32) * 0.1
    return w1, b1, w2, b2


def reference_forward(x, batch_index, params, num_repertoires):
    """Pure-JAX reference mirroring the PyTorch forward (ids 0..R-1 present)."""
    w1, b1, w2, b2 = params
    outs = []
    for r in range(num_repertoires):
        m = batch_index == r
        xr = x[m]                                          # (n_r, D)
        s = jnp.tanh(xr @ w1 + b1) @ w2 + b2               # (n_r, 1)
        w = jax.nn.softmax(s, axis=0)                      # (n_r, 1)
        outs.append(jnp.sum(w * xr, axis=0))               # (D,)
    return jnp.stack(outs, axis=0)


if __name__ == "__main__":
    N, D, A, OUT = 300, 32, 16, 1   # instances, input_dim, attention_dim, output_dim
    R = 3                            # repertoires (ids 0..R-1)

    key = jax.random.PRNGKey(0)
    kx, kp = jax.random.split(key)
    x = jax.random.normal(kx, (N, D), jnp.float32)
    batch_index = jnp.repeat(jnp.arange(R, dtype=jnp.int32), N // R)  # 100 rows each
    params = init_params(kp, D, A, OUT)

    ref = reference_forward(x, batch_index, params, R)

    # Multi-tile path: tile_n=128 -> 3 row tiles (exercises streaming accumulation).
    out_multi = jax.block_until_ready(
        attention_layer_forward(x, batch_index, params, R, tile_n=128))
    # Auto tiling: small N collapses to a single row tile / single grid step.
    out_auto = jax.block_until_ready(
        attention_layer_forward(x, batch_index, params, R))

    for name, out in (("multi_tile", out_multi), ("auto_tile", out_auto)):
        assert out.shape == (R, D), (name, out.shape)
        err = float(jnp.max(jnp.abs(out - ref)))
        # Tolerance covers the bf16 x / scatter operands (accumulation is f32).
        assert jnp.allclose(out, ref, atol=3e-2, rtol=3e-2), (
            f"{name}: mismatch vs reference (max abs err {err})")

    print("KERNEL_OK")
</pallas_src>

<mosaic_0001>
module attributes {stable_mosaic.version = 11 : i64} {
  func.func @_attention_kernel(%arg0: i32, %arg1: memref<1x128xi32, #tpu.memory_space<vmem>>, %arg2: memref<128x32xbf16, #tpu.memory_space<vmem>>, %arg3: memref<32x16xbf16, #tpu.memory_space<vmem>>, %arg4: memref<1x16xf32, #tpu.memory_space<vmem>>, %arg5: memref<16x1xf32, #tpu.memory_space<vmem>>, %arg6: memref<8x32xf32, #tpu.memory_space<vmem>>, %arg7: memref<8x1xf32, #tpu.memory_space<vmem>>) attributes {dimension_semantics = [#tpu.dimension_semantics<arbitrary>], iteration_bounds = array<i64: 3>, scalar_prefetch = 0 : i64, scratch_operands = 1 : i64, tpu.core_type = #tpu.core_type<tc>, window_params = [{transform_indices = @transform_0, window_bounds = array<i64: 1, 128>}, {transform_indices = @transform_1, window_bounds = array<i64: 128, 32>}, {pipeline_mode = #tpu.pipeline_mode<synchronous>, transform_indices = @transform_2, window_bounds = array<i64: 32, 16>}, {pipeline_mode = #tpu.pipeline_mode<synchronous>, transform_indices = @transform_3, window_bounds = array<i64: 1, 16>}, {pipeline_mode = #tpu.pipeline_mode<synchronous>, transform_indices = @transform_4, window_bounds = array<i64: 16, 1>}, {pipeline_mode = #tpu.pipeline_mode<synchronous>, transform_indices = @transform_5, window_bounds = array<i64: 8, 32>}]} {
    %c0_i32 = arith.constant 0 : i32
    %0 = arith.cmpi eq, %arg0, %c0_i32 : i32
    %1 = arith.extui %0 : i1 to i32
    %c0_i32_0 = arith.constant 0 : i32
    %2 = arith.cmpi ne, %1, %c0_i32_0 : i32
    scf.if %2 {
      %cst_25 = arith.constant 0.000000e+00 : f32
      %43 = vector.broadcast %cst_25 : f32 to vector<8x32xf32>
      %c0_26 = arith.constant 0 : index
      %c0_27 = arith.constant 0 : index
      %44 = vector.load %arg6[%c0_26, %c0_27] : memref<8x32xf32, #tpu.memory_space<vmem>>, vector<8x32xf32>
      tpu.vector_store %arg6[%c0_26, %c0_27], %43 {strides = array<i32>} : memref<8x32xf32, #tpu.memory_space<vmem>>, vector<8x32xf32>,
      %cst_28 = arith.constant 0.000000e+00 : f32
      %45 = vector.broadcast %cst_28 : f32 to vector<8x1xf32>
      %c0_29 = arith.constant 0 : index
      %c0_30 = arith.constant 0 : index
      %46 = vector.load %arg7[%c0_29, %c0_30] : memref<8x1xf32, #tpu.memory_space<vmem>>, vector<8x1xf32>
      tpu.vector_store %arg7[%c0_29, %c0_30], %45 {strides = array<i32>} : memref<8x1xf32, #tpu.memory_space<vmem>>, vector<8x1xf32>,
    } else {
    }
    %c0 = arith.constant 0 : index
    %c0_1 = arith.constant 0 : index
    %3 = vector.load %arg2[%c0, %c0_1] : memref<128x32xbf16, #tpu.memory_space<vmem>>, vector<128x32xbf16>
    %c0_2 = arith.constant 0 : index
    %c0_3 = arith.constant 0 : index
    %4 = vector.load %arg3[%c0_2, %c0_3] : memref<32x16xbf16, #tpu.memory_space<vmem>>, vector<32x16xbf16>
    %cst = arith.constant dense<0.000000e+00> : vector<128x16xf32>
    %5 = tpu.matmul %3, %4, %cst {dimension_numbers = #tpu.dot_dimension_numbers<[1], [0], [0], [1], [0, 0, 1, 1], [], []>} : vector<128x32xbf16>, vector<32x16xbf16>, vector<128x16xf32> -> vector<128x16xf32>
    %c0_4 = arith.constant 0 : index
    %c0_5 = arith.constant 0 : index
    %6 = vector.load %arg4[%c0_4, %c0_5] : memref<1x16xf32, #tpu.memory_space<vmem>>, vector<1x16xf32>
    %7 = vector.broadcast %6 : vector<1x16xf32> to vector<128x16xf32>
    %8 = arith.addf %5, %7 : vector<128x16xf32>
    %9 = math.tanh %8 : vector<128x16xf32>
    %c0_6 = arith.constant 0 : index
    %c0_7 = arith.constant 0 : index
    %10 = vector.load %arg5[%c0_6, %c0_7] : memref<16x1xf32, #tpu.memory_space<vmem>>, vector<16x1xf32>
    %cst_8 = arith.constant dense<0.000000e+00> : vector<128x1xf32>
    %11 = tpu.matmul %9, %10, %cst_8 {dimension_numbers = #tpu.dot_dimension_numbers<[1], [0], [0], [1], [0, 0, 1, 1], [], []>} : vector<128x16xf32>, vector<16x1xf32>, vector<128x1xf32> -> vector<128x1xf32>
    %c0_9 = arith.constant 0 : index
    %c0_10 = arith.constant 0 : index
    %12 = vector.load %arg5[%c0_9, %c0_10] : memref<16x1xf32, #tpu.memory_space<vmem>>, vector<16x1xf32>
    %13 = math.absf %12 : vector<16x1xf32>
    %cst_11 = arith.constant dense<0.000000e+00> : vector<1xf32>
    %14 = vector.multi_reduction <add>, %13, %cst_11 [0] : vector<16x1xf32> to vector<1xf32>
    %15 = vector.shape_cast %14 : vector<1xf32> to vector<1x1xf32>
    %16 = vector.broadcast %15 : vector<1x1xf32> to vector<128x1xf32>
    %17 = arith.subf %11, %16 : vector<128x1xf32>
    %18 = math.exp %17 : vector<128x1xf32>
    %19 = tpu.iota {dimensions = array<i32: 0>} : vector<8x1xi32>
    %c0_12 = arith.constant 0 : index
    %c0_13 = arith.constant 0 : index
    %20 = vector.load %arg1[%c0_12, %c0_13] : memref<1x128xi32, #tpu.memory_space<vmem>>, vector<1x128xi32>
    %21 = vector.broadcast %20 : vector<1x128xi32> to vector<8x128xi32>
    %22 = vector.broadcast %19 : vector<8x1xi32> to vector<8x128xi32>
    %23 = arith.cmpi eq, %21, %22 : vector<8x128xi32>
    %24 = arith.extui %23 : vector<8x128xi1> to vector<8x128xi32>
    %25 = arith.sitofp %24 : vector<8x128xi32> to vector<8x128xf32>
    %26 = arith.truncf %25 : vector<8x128xf32> to vector<8x128xbf16>
    %27 = arith.extf %3 : vector<128x32xbf16> to vector<128x32xf32>
    %28 = vector.broadcast %18 : vector<128x1xf32> to vector<128x32xf32>
    %29 = arith.mulf %28, %27 : vector<128x32xf32>
    %30 = arith.truncf %29 : vector<128x32xf32> to vector<128x32xbf16>
    %c0_14 = arith.constant 0 : index
    %c0_15 = arith.constant 0 : index
    %31 = vector.load %arg6[%c0_14, %c0_15] : memref<8x32xf32, #tpu.memory_space<vmem>>, vector<8x32xf32>
    %cst_16 = arith.constant dense<0.000000e+00> : vector<8x32xf32>
    %32 = tpu.matmul %26, %30, %cst_16 {dimension_numbers = #tpu.dot_dimension_numbers<[1], [0], [0], [1], [0, 0, 1, 1], [], []>} : vector<8x128xbf16>, vector<128x32xbf16>, vector<8x32xf32> -> vector<8x32xf32>
    %33 = arith.addf %31, %32 : vector<8x32xf32>
    %c0_17 = arith.constant 0 : index
    %c0_18 = arith.constant 0 : index
    %34 = vector.load %arg6[%c0_17, %c0_18] : memref<8x32xf32, #tpu.memory_space<vmem>>, vector<8x32xf32>
    tpu.vector_store %arg6[%c0_17, %c0_18], %33 {strides = array<i32>} : memref<8x32xf32, #tpu.memory_space<vmem>>, vector<8x32xf32>,
    %c0_19 = arith.constant 0 : index
    %c0_20 = arith.constant 0 : index
    %35 = vector.load %arg7[%c0_19, %c0_20] : memref<8x1xf32, #tpu.memory_space<vmem>>, vector<8x1xf32>
    %36 = arith.truncf %18 : vector<128x1xf32> to vector<128x1xbf16>
    %cst_21 = arith.constant dense<0.000000e+00> : vector<8x1xf32>
    %37 = tpu.matmul %26, %36, %cst_21 {dimension_numbers = #tpu.dot_dimension_numbers<[1], [0], [0], [1], [0, 0, 1, 1], [], []>} : vector<8x128xbf16>, vector<128x1xbf16>, vector<8x1xf32> -> vector<8x1xf32>
    %38 = arith.addf %35, %37 : vector<8x1xf32>
    %c0_22 = arith.constant 0 : index
    %c0_23 = arith.constant 0 : index
    %39 = vector.load %arg7[%c0_22, %c0_23] : memref<8x1xf32, #tpu.memory_space<vmem>>, vector<8x1xf32>
    tpu.vector_store %arg7[%c0_22, %c0_23], %38 {strides = array<i32>} : memref<8x1xf32, #tpu.memory_space<vmem>>, vector<8x1xf32>,
    %c2_i32 = arith.constant 2 : i32
    %40 = arith.cmpi eq, %arg0, %c2_i32 : i32
    %41 = arith.extui %40 : i1 to i32
    %c0_i32_24 = arith.constant 0 : i32
    %42 = arith.cmpi ne, %41, %c0_i32_24 : i32
    scf.if %42 {
      %c0_25 = arith.constant 0 : index
      %c0_26 = arith.constant 0 : index
      %43 = vector.load %arg7[%c0_25, %c0_26] : memref<8x1xf32, #tpu.memory_space<vmem>>, vector<8x1xf32>
      %cst_27 = arith.constant 0.000000e+00 : f32
      %44 = vector.broadcast %cst_27 : f32 to vector<8x1xf32>
      %45 = arith.cmpf ogt, %43, %44 : vector<8x1xf32>
      %46 = tpu.reciprocal %43 : vector<8x1xf32> -> vector<8x1xf32>
      %cst_28 = arith.constant 0.000000e+00 : f32
      %47 = vector.broadcast %cst_28 : f32 to vector<8x1xf32>
      %48 = arith.select %45, %46, %47 : vector<8x1xi1>, vector<8x1xf32>
      %c0_29 = arith.constant 0 : index
      %c0_30 = arith.constant 0 : index
      %49 = vector.load %arg6[%c0_29, %c0_30] : memref<8x32xf32, #tpu.memory_space<vmem>>, vector<8x32xf32>
      %50 = vector.broadcast %48 : vector<8x1xf32> to vector<8x32xf32>
      %51 = arith.mulf %49, %50 : vector<8x32xf32>
      %c0_31 = arith.constant 0 : index
      %c0_32 = arith.constant 0 : index
      %52 = vector.load %arg6[%c0_31, %c0_32] : memref<8x32xf32, #tpu.memory_space<vmem>>, vector<8x32xf32>
      tpu.vector_store %arg6[%c0_31, %c0_32], %51 {strides = array<i32>} : memref<8x32xf32, #tpu.memory_space<vmem>>, vector<8x32xf32>,
    } else {
    }
    return
  }
  func.func @transform_0(%arg0: i32) -> (i32, i32) {
    %c0_i32 = arith.constant 0 : i32
    %c0_i32_0 = arith.constant 0 : i32
    return %c0_i32, %arg0 : i32, i32
  }
  func.func @transform_1(%arg0: i32) -> (i32, i32) {
    %c0_i32 = arith.constant 0 : i32
    %c0_i32_0 = arith.constant 0 : i32
    return %arg0, %c0_i32 : i32, i32
  }
  func.func @transform_2(%arg0: i32) -> (i32, i32) {
    %c0_i32 = arith.constant 0 : i32
    %c0_i32_0 = arith.constant 0 : i32
    %c0_i32_1 = arith.constant 0 : i32
    return %c0_i32, %c0_i32_0 : i32, i32
  }
  func.func @transform_3(%arg0: i32) -> (i32, i32) {
    %c0_i32 = arith.constant 0 : i32
    %c0_i32_0 = arith.constant 0 : i32
    %c0_i32_1 = arith.constant 0 : i32
    return %c0_i32, %c0_i32_0 : i32, i32
  }
  func.func @transform_4(%arg0: i32) -> (i32, i32) {
    %c0_i32 = arith.constant 0 : i32
    %c0_i32_0 = arith.constant 0 : i32
    %c0_i32_1 = arith.constant 0 : i32
    return %c0_i32, %c0_i32_0 : i32, i32
  }
  func.func @transform_5(%arg0: i32) -> (i32, i32) {
    %c0_i32 = arith.constant 0 : i32
    %c0_i32_0 = arith.constant 0 : i32
    %c0_i32_1 = arith.constant 0 : i32
    return %c0_i32, %c0_i32_0 : i32, i32
  }
}

</mosaic_0001>

<llo_original>
// kernel: tpu_custom_call.1
$region0: #{tpu_custom_call.1}
  #allocation0 [shape = 'u32[]', space=smem, size = 0x4, offset = 0x4, fixed_abs, tag = 'smem constant byte address 0x4 - core index']
  #allocation1 [shape = 'u32[72,128]{1,0:T(1,128)}', space=vmem, size = 0x9000, scoped, tag = 'internal scratch']
  #allocation2 [shape = 'f32[8,1]{1,0:T(8,128)}', space=vmem, size = 0x1000, scoped, tag = 'scratch operand']
  %s0 = inlined_call_operand.vmem [shape: s32[1,384], index: 0, kind: input, shape index: {}]
  %s1 = inlined_call_operand.vmem [shape: bf16[384,32], index: 1, kind: input, shape index: {}]
  %s2 = inlined_call_operand.vmem [shape: bf16[32,16], index: 2, kind: input, shape index: {}]
  %s3 = inlined_call_operand.vmem [shape: f32[1,16], index: 3, kind: input, shape index: {}]
  %s4 = inlined_call_operand.vmem [shape: f32[16,1], index: 4, kind: input, shape index: {}]
  %s5 = inlined_call_operand.hbm [shape: f32[8,32], index: 5, kind: output, shape index: {}]
  %s6 = sld [smem:[#allocation0]]
  $region61: #{tpu_custom_call.1} parent=0
    _
  %s8 = ssub.s32 1, %s6
  %s9 = scalar_select 0, %s8, %s6
  $region1: #{tpu_custom_call.1} parent=0
    #allocation3 [shape = 'u8[4096]{0}', space=vmem, size = 0x1000, scoped, tag = 'output window, operand 0, single buffered']
    #allocation4 [shape = 's32[2]{0}', space=sflag, size = 0x8, scoped, tag = 'scoped memory for tpu_custom_call.1']
    %10 = vsyncpa [#allocation4], 0
    loop: start=0, step=1, limit=5
    $region2: #{tpu_custom_call.1} parent=1 // loop_pre_header
      _
    $region3: #{tpu_custom_call.1} parent=1 // loop_header
      %s12 = sphi 0, %s16
      %p13 = scmp.ge.s32.totalorder %s12, 5
      %s22 = sphi 0, %s24
      %s25 = sphi 0, %s22
      %s26 = sphi 0, %s25
      %s42 = sphi 0, %s26
      %s48 = sphi 0, %s50
      %s51 = sphi 0, %s48
      %s52 = sphi 0, %s51
      %s68 = sphi 0, %s52
      %s72 = sphi 0, %s72
      %s74 = sphi 0, %s72
      %s75 = sphi 0, %s74
      %s89 = sphi 0, %s75
      %s93 = sphi 0, %s93
      %s95 = sphi 0, %s93
      %s96 = sphi 0, %s95
      %s110 = sphi 0, %s96
      %s114 = sphi 0, %s114
      %s116 = sphi 0, %s114
      %s117 = sphi 0, %s116
      %s131 = sphi 0, %s117
      %s135 = sphi 0, %s135
      %s137 = sphi 0, %s135
      %s138 = sphi 0, %s137
      %s152 = sphi 0, %s138
    $region4: #{tpu_custom_call.1} parent=1 // loop_header_branch
      %15 = sbr.rel (%p13) target = $region8
    $region5: #{tpu_custom_call.1} parent=1 // loop_body
      %s17 = ssub.s32 %s12, 1
      %s18 = ssub.s32 %s12, 2
      %s19 = sadd.s32 %s12, 1
      %s20 = ssub.s32 %s12, %s19
      %p21 = scmp.eq.s32.totalorder %s20, 0
      %s23 = sadd.s32 %s22, 1
      %s24 = scalar_select %p21, %s22, %s23
      %p27 = pneg %p21
      %p28 = scmp.eq.s32.totalorder %s12, 2
      %p29 = por %p27, %p28
      %p30 = scmp.ne.s32.totalorder %s22, %s25
      %p31 = scmp.eq.s32.totalorder %s12, 0
      %p32 = por %p30, %p31
      %p33 = scmp.ne.s32.totalorder %s22, %s25
      %p34 = scmp.eq.s32.totalorder %s17, 2
      %p35 = por %p33, %p34
      %p36 = scmp.ne.s32.totalorder %s25, %s26
      %p37 = scmp.eq.s32.totalorder %s17, 0
      %p38 = por %p36, %p37
      %p39 = scmp.ne.s32.totalorder %s25, %s26
      %p40 = scmp.eq.s32.totalorder %s18, 2
      %p41 = por %p39, %p40
      %p43 = scmp.ne.s32.totalorder %s26, %s42
      %p44 = scmp.eq.s32.totalorder %s18, 0
      %p45 = por %p43, %p44
      %s46 = ssub.s32 %s12, %s19
      %p47 = scmp.eq.s32.totalorder %s46, 0
      %s49 = sadd.s32 %s48, 1
      %s50 = scalar_select %p47, %s48, %s49
      %p53 = pneg %p47
      %p54 = scmp.eq.s32.totalorder %s12, 2
      %p55 = por %p53, %p54
      %p56 = scmp.ne.s32.totalorder %s48, %s51
      %p57 = scmp.eq.s32.totalorder %s12, 0
      %p58 = por %p56, %p57
      %p59 = scmp.ne.s32.totalorder %s48, %s51
      %p60 = scmp.eq.s32.totalorder %s17, 2
      %p61 = por %p59, %p60
      %p62 = scmp.ne.s32.totalorder %s51, %s52
      %p63 = scmp.eq.s32.totalorder %s17, 0
      %p64 = por %p62, %p63
      %p65 = scmp.ne.s32.totalorder %s51, %s52
      %p66 = scmp.eq.s32.totalorder %s18, 2
      %p67 = por %p65, %p66
      %p69 = scmp.ne.s32.totalorder %s52, %s68
      %p70 = scmp.eq.s32.totalorder %s18, 0
      %p71 = por %p69, %p70
      %s73 = sadd.s32 %s72, 1
      %p76 = scmp.eq.s32.totalorder %s12, 2
      %p77 = scmp.ne.s32.totalorder %s72, %s74
      %p78 = scmp.eq.s32.totalorder %s12, 0
      %p79 = por %p77, %p78
      %p80 = scmp.ne.s32.totalorder %s72, %s74
      %p81 = scmp.eq.s32.totalorder %s17, 2
      %p82 = por %p80, %p81
      %p83 = scmp.ne.s32.totalorder %s74, %s75
      %p84 = scmp.eq.s32.totalorder %s17, 0
      %p85 = por %p83, %p84
      %p86 = scmp.ne.s32.totalorder %s74, %s75
      %p87 = scmp.eq.s32.totalorder %s18, 2
      %p88 = por %p86, %p87
      %p90 = scmp.ne.s32.totalorder %s75, %s89
      %p91 = scmp.eq.s32.totalorder %s18, 0
      %p92 = por %p90, %p91
      %s94 = sadd.s32 %s93, 1
      %p97 = scmp.eq.s32.totalorder %s12, 2
      %p98 = scmp.ne.s32.totalorder %s93, %s95
      %p99 = scmp.eq.s32.totalorder %s12, 0
      %p100 = por %p98, %p99
      %p101 = scmp.ne.s32.totalorder %s93, %s95
      %p102 = scmp.eq.s32.totalorder %s17, 2
      %p103 = por %p101, %p102
      %p104 = scmp.ne.s32.totalorder %s95, %s96
      %p105 = scmp.eq.s32.totalorder %s17, 0
      %p106 = por %p104, %p105
      %p107 = scmp.ne.s32.totalorder %s95, %s96
      %p108 = scmp.eq.s32.totalorder %s18, 2
      %p109 = por %p107, %p108
      %p111 = scmp.ne.s32.totalorder %s96, %s110
      %p112 = scmp.eq.s32.totalorder %s18, 0
      %p113 = por %p111, %p112
      %s115 = sadd.s32 %s114, 1
      %p118 = scmp.eq.s32.totalorder %s12, 2
      %p119 = scmp.ne.s32.totalorder %s114, %s116
      %p120 = scmp.eq.s32.totalorder %s12, 0
      %p121 = por %p119, %p120
      %p122 = scmp.ne.s32.totalorder %s114, %s116
      %p123 = scmp.eq.s32.totalorder %s17, 2
      %p124 = por %p122, %p123
      %p125 = scmp.ne.s32.totalorder %s116, %s117
      %p126 = scmp.eq.s32.totalorder %s17, 0
      %p127 = por %p125, %p126
      %p128 = scmp.ne.s32.totalorder %s116, %s117
      %p129 = scmp.eq.s32.totalorder %s18, 2
      %p130 = por %p128, %p129
      %p132 = scmp.ne.s32.totalorder %s117, %s131
      %p133 = scmp.eq.s32.totalorder %s18, 0
      %p134 = por %p132, %p133
      %s136 = sadd.s32 %s135, 1
      %p139 = scmp.eq.s32.totalorder %s12, 2
      %p140 = scmp.ne.s32.totalorder %s135, %s137
      %p141 = scmp.eq.s32.totalorder %s12, 0
      %p142 = por %p140, %p141
      %p143 = scmp.ne.s32.totalorder %s135, %s137
      %p144 = scmp.eq.s32.totalorder %s17, 2
      %p145 = por %p143, %p144
      %p146 = scmp.ne.s32.totalorder %s137, %s138
      %p147 = scmp.eq.s32.totalorder %s17, 0
      %p148 = por %p146, %p147
      %p149 = scmp.ne.s32.totalorder %s137, %s138
      %p150 = scmp.eq.s32.totalorder %s18, 2
      %p151 = por %p149, %p150
      %p153 = scmp.ne.s32.totalorder %s138, %s152
      %p154 = scmp.eq.s32.totalorder %s18, 0
      %p155 = por %p153, %p154
      %p156 = scmp.le.s32.totalorder 1, %s12
      %p157 = scmp.lt.s32.totalorder %s12, 4
      %p158 = pnand %p156, %p157
      %p159 = pneg %p158
      // Predicated region
      $region9: #{tpu_custom_call.1} parent=5 // pred_check
        _
      $region10: #{tpu_custom_call.1} parent=5 // pred_check_branch
        %161 = sbr.rel (%p158) target = $region12
      $region11: #{tpu_custom_call.1} parent=5 // pred_region
        %s162 = ssub.s32 %s12, 1
        // Predicated region
        $region13: #{tpu_custom_call.1} parent=11 // pred_check
          %p163 = pneg %p85
        $region14: #{tpu_custom_call.1} parent=11 // pred_check_branch
          %165 = sbr.rel (%p163) target = $region16
        $region15: #{tpu_custom_call.1} parent=11 // pred_region
          _
        $region16: #{tpu_custom_call.1} parent=11 // pred_fallthru
          _
        // Predicated region
        $region17: #{tpu_custom_call.1} parent=11 // pred_check
          %p166 = pneg %p106
        $region18: #{tpu_custom_call.1} parent=11 // pred_check_branch
          %168 = sbr.rel (%p166) target = $region20
        $region19: #{tpu_custom_call.1} parent=11 // pred_region
          _
        $region20: #{tpu_custom_call.1} parent=11 // pred_fallthru
          _
        // Predicated region
        $region21: #{tpu_custom_call.1} parent=11 // pred_check
          %p169 = pneg %p127
        $region22: #{tpu_custom_call.1} parent=11 // pred_check_branch
          %171 = sbr.rel (%p169) target = $region24
        $region23: #{tpu_custom_call.1} parent=11 // pred_region
          _
        $region24: #{tpu_custom_call.1} parent=11 // pred_fallthru
          _
      $region12: #{tpu_custom_call.1} parent=5 // pred_fallthru
        _
      %p172 = scmp.lt.s32.totalorder %s12, 3
      // Predicated region
      $region25: #{tpu_custom_call.1} parent=5 // pred_check
        %p173 = pneg %p172
      $region26: #{tpu_custom_call.1} parent=5 // pred_check_branch
        %175 = sbr.rel (%p173) target = $region28
      $region27: #{tpu_custom_call.1} parent=5 // pred_region
        // Predicated region
        $region29: #{tpu_custom_call.1} parent=27 // pred_check
          %p176 = pneg %p32
        $region30: #{tpu_custom_call.1} parent=27 // pred_check_branch
          %178 = sbr.rel (%p176) target = $region32
        $region31: #{tpu_custom_call.1} parent=27 // pred_region
          %p179 = scmp.lt.s32.totalorder %s12, 2
          %s180 = scalar_select %p179, %s12, 2
          %s181 = scalar_lea.vmem %s0, %s180
        $region32: #{tpu_custom_call.1} parent=27 // pred_fallthru
          _
        // Predicated region
        $region33: #{tpu_custom_call.1} parent=27 // pred_check
          %p182 = pneg %p58
        $region34: #{tpu_custom_call.1} parent=27 // pred_check_branch
          %184 = sbr.rel (%p182) target = $region36
        $region35: #{tpu_custom_call.1} parent=27 // pred_region
          %s185 = smul.u32 16, %s12
          %p186 = scmp.lt.s32.totalorder %s185, 47
          %s187 = scalar_select %p186, %s185, 47
          %s188 = smul.addr %s187, 4
          %s189 = scalar_lea.vmem %s1, %s188
          %s190 = smul.u32 16, %s12
        $region36: #{tpu_custom_call.1} parent=27 // pred_fallthru
          _
      $region28: #{tpu_custom_call.1} parent=5 // pred_fallthru
        _
      %p191 = scmp.le.s32.totalorder 1, %s12
      %p192 = scmp.lt.s32.totalorder %s12, 4
      %p193 = pnand %p191, %p192
      %p194 = pneg %p193
      // Predicated region
      $region37: #{tpu_custom_call.1} parent=5 // pred_check
        _
      $region38: #{tpu_custom_call.1} parent=5 // pred_check_branch
        %196 = sbr.rel (%p193) target = $region40
      $region39: #{tpu_custom_call.1} parent=5 // pred_region
        %s197 = ssub.s32 %s12, 1
        %p198 = scmp.lt.s32.totalorder %s17, 2
        %s199 = scalar_select %p198, %s17, 2
        %s200 = scalar_lea.vmem %s0, %s199
        %p201 = pneg %p38
        %p202 = pneg %p35
        %s203 = smul.u32 16, %s17
        %p204 = scmp.lt.s32.totalorder %s203, 47
        %s205 = scalar_select %p204, %s203, 47
        %s206 = smul.addr %s205, 4
        %s207 = scalar_lea.vmem %s1, %s206
        %p208 = pneg %p64
        %p209 = pneg %p61
        %p210 = pneg %p85
        %p211 = pneg %p82
        %p212 = pneg %p106
        %p213 = pneg %p103
        %p214 = pneg %p127
        %p215 = pneg %p124
        %p216 = pneg %p148
        %p217 = pneg %p145
        %p218 = scmp.lt.s32.totalorder %s17, 2
        %s219 = scalar_select %p218, %s17, 2
        %s220 = scalar_lea.vmem %s0, %s219
        %s221 = smul.u32 16, %s17
        %p222 = scmp.lt.s32.totalorder %s221, 47
        %s223 = scalar_select %p222, %s221, 47
        %s224 = smul.addr %s223, 4
        %s225 = scalar_lea.vmem %s1, %s224
        %s226 = smul.u32 16, %s17
        %p228 = scmp.eq.s32.totalorder %s17, 0
        // Predicated region
        $region41: #{tpu_custom_call.1} parent=39 // pred_check
          %p229 = pneg %p228
        $region42: #{tpu_custom_call.1} parent=39 // pred_check_branch
          %231 = sbr.rel (%p229) target = $region44
        $region43: #{tpu_custom_call.1} parent=39 // pred_region
          %vm232 = vcmask 261120
          %233 = vst.msk [vmem:[#allocation3] sm:$0xff] %vm232, 0.0
          %vm234 = vcmask 7168
          %235 = vst.msk [vmem:[#allocation2] sm:$0xff] %vm234, 0.0
        $region44: #{tpu_custom_call.1} parent=39 // pred_fallthru
          _
        %v236 = vld [vmem:[%s225] sm:$0xf]
        %v237 = vld [vmem:[%s225 + $0x4] sm:$0xf]
        %v238 = vld [vmem:[%s225 + $0x8] sm:$0xf]
        %v239 = vld [vmem:[%s225 + $0xc] sm:$0xf]
        %v240 = vld [vmem:[%s225 + $0x10] sm:$0xf]
        %v241 = vld [vmem:[%s225 + $0x14] sm:$0xf]
        %v242 = vld [vmem:[%s225 + $0x18] sm:$0xf]
        %v243 = vld [vmem:[%s225 + $0x1c] sm:$0xf]
        %v244 = vld [vmem:[%s225 + $0x20] sm:$0xf]
        %v245 = vld [vmem:[%s225 + $0x24] sm:$0xf]
        %v246 = vld [vmem:[%s225 + $0x28] sm:$0xf]
        %v247 = vld [vmem:[%s225 + $0x2c] sm:$0xf]
        %v248 = vld [vmem:[%s225 + $0x30] sm:$0xf]
        %v249 = vld [vmem:[%s225 + $0x34] sm:$0xf]
        %v250 = vld [vmem:[%s225 + $0x38] sm:$0xf]
        %v251 = vld [vmem:[%s225 + $0x3c] sm:$0xf]
        %v252 = vld [vmem:[%s2] sm:$0xf]
        %v253 = vld [vmem:[%s2 + $0x4] sm:$0xf]
        %v254 = vld [vmem:[%s2 + $0x8] sm:$0xf]
        %v255 = vld [vmem:[%s2 + $0xc] sm:$0xf]
        %v256 = vld [vmem:[%s3] sm:$0x1]
        %v258 = vperm.slane %v256, 0
        %v276 = vunpack.c.l.b16 %v236
        %v277 = vunpack.c.l.b16 %v237
        %v278 = vunpack.c.l.b16 %v238
        %v279 = vunpack.c.l.b16 %v239
        %v280 = vunpack.c.l.b16 %v240
        %v281 = vunpack.c.l.b16 %v241
        %v282 = vunpack.c.l.b16 %v242
        %v283 = vunpack.c.l.b16 %v243
        %v284 = vunpack.c.l.b16 %v244
        %v285 = vunpack.c.l.b16 %v245
        %v286 = vunpack.c.l.b16 %v246
        %v287 = vunpack.c.l.b16 %v247
        %v288 = vunpack.c.l.b16 %v248
        %v289 = vunpack.c.l.b16 %v249
        %v290 = vunpack.c.l.b16 %v250
        %v291 = vunpack.c.l.b16 %v251
        %v292 = vpack.c.b16 %v277, %v276
        %v293 = vpack.c.b16 %v279, %v278
        %v294 = vpack.c.b16 %v281, %v280
        %v295 = vpack.c.b16 %v283, %v282
        %v296 = vpack.c.b16 %v285, %v284
        %v297 = vpack.c.b16 %v287, %v286
        %v298 = vpack.c.b16 %v289, %v288
        %v299 = vpack.c.b16 %v291, %v290
        %v304 = vunpack.c.l.b16 %v252
        %v305 = vunpack.c.l.b16 %v253
        %v306 = vunpack.c.l.b16 %v254
        %v307 = vunpack.c.l.b16 %v255
        %v308 = vpack.c.b16 %v305, %v304
        %v309 = vpack.c.b16 %v307, %v306
        %vm312 = vcmask 261120
        %v314 = vsel %vm312, %v292, 0
        %v317 = vsel %vm312, %v293, 0
        %v320 = vsel %vm312, %v294, 0
        %v323 = vsel %vm312, %v295, 0
        %v326 = vsel %vm312, %v296, 0
        %v329 = vsel %vm312, %v297, 0
        %v332 = vsel %vm312, %v298, 0
        %v335 = vsel %vm312, %v299, 0
        %337 = vmatpush.bf16.msra.mxu0 0
        %338 = vmatpush.bf16.msra.mxu0 0
        %339 = vmatpush.bf16.msra.mxu0 0
        %340 = vmatpush.bf16.msra.mxu0 0
        %341 = vmatpush.bf16.msra.mxu0 0
        %342 = vmatpush.bf16.msra.mxu0 0
        %343 = vmatpush.bf16.msra.mxu0 %v309
        %344 = vmatpush.bf16.msra.mxu0 %v308
        %345 = vmatmul.bf16.gmra.mxu0 %v314
        %v346 = vpop.f32.mrf.mxu0
        %v347 = vadd.f32 %v258, %v346
        %v348 = vpop.f32.mrf.mxu0
        %v349 = vadd.f32 %v258, %v348
        %350 = vmatmul.bf16.gmra.mxu0 %v317
        %v351 = vpop.f32.mrf.mxu0
        %v352 = vadd.f32 %v258, %v351
        %v353 = vpop.f32.mrf.mxu0
        %v354 = vadd.f32 %v258, %v353
        %355 = vmatmul.bf16.gmra.mxu0 %v320
        %v356 = vpop.f32.mrf.mxu0
        %v357 = vadd.f32 %v258, %v356
        %v358 = vpop.f32.mrf.mxu0
        %v359 = vadd.f32 %v258, %v358
        %360 = vmatmul.bf16.gmra.mxu0 %v323
        %v361 = vpop.f32.mrf.mxu0
        %v362 = vadd.f32 %v258, %v361
        %v363 = vpop.f32.mrf.mxu0
        %v364 = vadd.f32 %v258, %v363
        %365 = vmatmul.bf16.gmra.mxu0 %v326
        %v366 = vpop.f32.mrf.mxu0
        %v367 = vadd.f32 %v258, %v366
        %v368 = vpop.f32.mrf.mxu0
        %v369 = vadd.f32 %v258, %v368
        %370 = vmatmul.bf16.gmra.mxu0 %v329
        %v371 = vpop.f32.mrf.mxu0
        %v372 = vadd.f32 %v258, %v371
        %v373 = vpop.f32.mrf.mxu0
        %v374 = vadd.f32 %v258, %v373
        %375 = vmatmul.bf16.gmra.mxu0 %v332
        %v376 = vpop.f32.mrf.mxu0
        %v377 = vadd.f32 %v258, %v376
        %v378 = vpop.f32.mrf.mxu0
        %v379 = vadd.f32 %v258, %v378
        %380 = vmatmul.bf16.gmra.mxu0 %v335
        %v381 = vpop.f32.mrf.mxu0
        %v382 = vadd.f32 %v258, %v381
        %v383 = vpop.f32.mrf.mxu0
        %v384 = vadd.f32 %v258, %v383
        %385 = vdwg.mxu0
        %v386 = vtanh.pop %v347
        %v387 = vtanh.pop %v349
        %v388 = vtanh.pop %v352
        %v389 = vtanh.pop %v354
        %v390 = vtanh.pop %v357
        %v391 = vtanh.pop %v359
        %v392 = vtanh.pop %v362
        %v393 = vtanh.pop %v364
        %v394 = vtanh.pop %v367
        %v395 = vtanh.pop %v369
        %v396 = vtanh.pop %v372
        %v397 = vtanh.pop %v374
        %v398 = vtanh.pop %v377
        %v399 = vtanh.pop %v379
        %v400 = vtanh.pop %v382
        %v401 = vtanh.pop %v384
        %v402 = vld [vmem:[%s4] sm:$0xff]
        %v403 = vld [vmem:[%s4 + $0x8] sm:$0xff]
        %vm404 = vcmask 130048
        %v406 = vsel %vm404, %v386, 0
        %v409 = vsel %vm404, %v387, 0
        %v412 = vsel %vm404, %v388, 0
        %v415 = vsel %vm404, %v389, 0
        %v418 = vsel %vm404, %v390, 0
        %v421 = vsel %vm404, %v391, 0
        %v424 = vsel %vm404, %v392, 0
        %v427 = vsel %vm404, %v393, 0
        %v430 = vsel %vm404, %v394, 0
        %v433 = vsel %vm404, %v395, 0
        %v436 = vsel %vm404, %v396, 0
        %v439 = vsel %vm404, %v397, 0
        %v442 = vsel %vm404, %v398, 0
        %v445 = vsel %vm404, %v399, 0
        %v448 = vsel %vm404, %v400, 0
        %v451 = vsel %vm404, %v401, 0
        %453 = vmatpush.msra.mxu0 0.0
        %454 = vmatpush.msra.mxu0 0.0
        %455 = vmatpush.msra.mxu0 0.0
        %456 = vmatpush.msra.mxu0 0.0
        %457 = vmatpush.msra.mxu0 0.0
        %458 = vmatpush.msra.mxu0 0.0
        %459 = vmatpush.msra.mxu0 0.0
        %460 = vmatpush.msra.mxu0 0.0
        %461 = vmatpush.msra.mxu0 0.0
        %462 = vmatpush.msra.mxu0 0.0
        %463 = vmatpush.msra.mxu0 0.0
        %464 = vmatpush.msra.mxu0 0.0
        %465 = vmatpush.msra.mxu0 0.0
        %466 = vmatpush.msra.mxu0 0.0
        %467 = vmatpush.msra.mxu0 %v403
        %468 = vmatpush.msra.mxu0 %v402
        %469 = vmatmul.f32.gmra.mxu0 %v406
        %v470 = vpop.f32.mrf.mxu0
        %v471 = vadd.f32 0.0, %v470
        %472 = vmatmul.f32.gmra.mxu0 %v409
        %v473 = vpop.f32.mrf.mxu0
        %v474 = vadd.f32 0.0, %v473
        %475 = vmatmul.f32.gmra.mxu0 %v412
        %v476 = vpop.f32.mrf.mxu0
        %v477 = vadd.f32 0.0, %v476
        %478 = vmatmul.f32.gmra.mxu0 %v415
        %v479 = vpop.f32.mrf.mxu0
        %v480 = vadd.f32 0.0, %v479
        %481 = vmatmul.f32.gmra.mxu0 %v418
        %v482 = vpop.f32.mrf.mxu0
        %v483 = vadd.f32 0.0, %v482
        %484 = vmatmul.f32.gmra.mxu0 %v421
        %v485 = vpop.f32.mrf.mxu0
        %v486 = vadd.f32 0.0, %v485
        %487 = vmatmul.f32.gmra.mxu0 %v424
        %v488 = vpop.f32.mrf.mxu0
        %v489 = vadd.f32 0.0, %v488
        %490 = vmatmul.f32.gmra.mxu0 %v427
        %v491 = vpop.f32.mrf.mxu0
        %v492 = vadd.f32 0.0, %v491
        %493 = vmatmul.f32.gmra.mxu0 %v430
        %v494 = vpop.f32.mrf.mxu0
        %v495 = vadd.f32 0.0, %v494
        %496 = vmatmul.f32.gmra.mxu0 %v433
        %v497 = vpop.f32.mrf.mxu0
        %v498 = vadd.f32 0.0, %v497
        %499 = vmatmul.f32.gmra.mxu0 %v436
        %v500 = vpop.f32.mrf.mxu0
        %v501 = vadd.f32 0.0, %v500
        %502 = vmatmul.f32.gmra.mxu0 %v439
        %v503 = vpop.f32.mrf.mxu0
        %v504 = vadd.f32 0.0, %v503
        %505 = vmatmul.f32.gmra.mxu0 %v442
        %v506 = vpop.f32.mrf.mxu0
        %v507 = vadd.f32 0.0, %v506
        %508 = vmatmul.f32.gmra.mxu0 %v445
        %v509 = vpop.f32.mrf.mxu0
        %v510 = vadd.f32 0.0, %v509
        %511 = vmatmul.f32.gmra.mxu0 %v448
        %v512 = vpop.f32.mrf.mxu0
        %v513 = vadd.f32 0.0, %v512
        %514 = vmatmul.f32.gmra.mxu0 %v451
        %v515 = vpop.f32.mrf.mxu0
        %v516 = vadd.f32 0.0, %v515
        %517 = vdwg.mxu0
        %v518 = vand.u32 2147483647, %v402
        %v519 = vand.u32 2147483647, %v403
        %vm520 = vcmask 7168
        %v521 = vsel %vm520, %v518, 0.0
        %v522 = vsel %vm520, %v519, 0.0
        %v523 = vadd.f32 %v521, %v522
        %v524 = vrot.slane %v523, 4
        %v525 = vadd.f32 %v523, %v524
        %v526 = vrot.slane %v525, 2
        %v527 = vadd.f32 %v525, %v526
        %v528 = vrot.slane %v527, 1
        %v529 = vadd.f32 %v527, %v528
        %v530 = vsub.f32 %v471, %v529
        %v531 = vsub.f32 %v474, %v529
        %v532 = vsub.f32 %v477, %v529
        %v533 = vsub.f32 %v480, %v529
        %v534 = vsub.f32 %v483, %v529
        %v535 = vsub.f32 %v486, %v529
        %v536 = vsub.f32 %v489, %v529
        %v537 = vsub.f32 %v492, %v529
        %v538 = vsub.f32 %v495, %v529
        %v539 = vsub.f32 %v498, %v529
        %v540 = vsub.f32 %v501, %v529
        %v541 = vsub.f32 %v504, %v529
        %v542 = vsub.f32 %v507, %v529
        %v543 = vsub.f32 %v510, %v529
        %v544 = vsub.f32 %v513, %v529
        %v545 = vsub.f32 %v516, %v529
        %v546 = vmul.f32 %v530, 1.442695
        %v547 = vpow.pop %v546
        %v548 = vmul.f32 %v531, 1.442695
        %v549 = vpow.pop %v548
        %v550 = vmul.f32 %v532, 1.442695
        %v551 = vpow.pop %v550
        %v552 = vmul.f32 %v533, 1.442695
        %v553 = vpow.pop %v552
        %v554 = vmul.f32 %v534, 1.442695
        %v555 = vpow.pop %v554
        %v556 = vmul.f32 %v535, 1.442695
        %v557 = vpow.pop %v556
        %v558 = vmul.f32 %v536, 1.442695
        %v559 = vpow.pop %v558
        %v560 = vmul.f32 %v537, 1.442695
        %v561 = vpow.pop %v560
        %v562 = vmul.f32 %v538, 1.442695
        %v563 = vpow.pop %v562
        %v564 = vmul.f32 %v539, 1.442695
        %v565 = vpow.pop %v564
        %v566 = vmul.f32 %v540, 1.442695
        %v567 = vpow.pop %v566
        %v568 = vmul.f32 %v541, 1.442695
        %v569 = vpow.pop %v568
        %v570 = vmul.f32 %v542, 1.442695
        %v571 = vpow.pop %v570
        %v572 = vmul.f32 %v543, 1.442695
        %v573 = vpow.pop %v572
        %v574 = vmul.f32 %v544, 1.442695
        %v575 = vpow.pop %v574
        %v576 = vmul.f32 %v545, 1.442695
        %v577 = vpow.pop %v576
        %v578 = vlaneseq
        %v579 = vshrl.u32 %v578, 7
        %v580 = vld [vmem:[%s220] sm:$0x1]
        %v581 = vperm.slane %v580, 0
        %vm582 = vcmp.eq.s32.totalorder %v581, %v579
        %v583 = vsel %vm582, 1, 0
        %v584 = vcvt.s32.f32 %v583
        %v585 = vpack.c.bf16 %v584, %v584
        %v586 = vunpack.c.l.bf16 %v236
        %v587 = vunpack.c.l.bf16 %v237
        %v588 = vunpack.c.l.bf16 %v238
        %v589 = vunpack.c.l.bf16 %v239
        %v590 = vunpack.c.l.bf16 %v240
        %v591 = vunpack.c.l.bf16 %v241
        %v592 = vunpack.c.l.bf16 %v242
        %v593 = vunpack.c.l.bf16 %v243
        %v594 = vunpack.c.l.bf16 %v244
        %v595 = vunpack.c.l.bf16 %v245
        %v596 = vunpack.c.l.bf16 %v246
        %v597 = vunpack.c.l.bf16 %v247
        %v598 = vunpack.c.l.bf16 %v248
        %v599 = vunpack.c.l.bf16 %v249
        %v600 = vunpack.c.l.bf16 %v250
        %v601 = vunpack.c.l.bf16 %v251
        %603 = vset.pattern.permute.xlu0 0
        %604 = vperm.xlu0 %603, %v547
        %v605 = vpop.permute.xlu0 %604
        %608 = vset.pattern.permute.xlu0 0
        %609 = vperm.xlu0 %608, %v549
        %v610 = vpop.permute.xlu0 %609
        %613 = vset.pattern.permute.xlu0 0
        %614 = vperm.xlu0 %613, %v551
        %v615 = vpop.permute.xlu0 %614
        %618 = vset.pattern.permute.xlu0 0
        %619 = vperm.xlu0 %618, %v553
        %v620 = vpop.permute.xlu0 %619
        %623 = vset.pattern.permute.xlu0 0
        %624 = vperm.xlu0 %623, %v555
        %v625 = vpop.permute.xlu0 %624
        %628 = vset.pattern.permute.xlu0 0
        %629 = vperm.xlu0 %628, %v557
        %v630 = vpop.permute.xlu0 %629
        %633 = vset.pattern.permute.xlu0 0
        %634 = vperm.xlu0 %633, %v559
        %v635 = vpop.permute.xlu0 %634
        %638 = vset.pattern.permute.xlu0 0
        %639 = vperm.xlu0 %638, %v561
        %v640 = vpop.permute.xlu0 %639
        %643 = vset.pattern.permute.xlu0 0
        %644 = vperm.xlu0 %643, %v563
        %v645 = vpop.permute.xlu0 %644
        %648 = vset.pattern.permute.xlu0 0
        %649 = vperm.xlu0 %648, %v565
        %v650 = vpop.permute.xlu0 %649
        %653 = vset.pattern.permute.xlu0 0
        %654 = vperm.xlu0 %653, %v567
        %v655 = vpop.permute.xlu0 %654
        %658 = vset.pattern.permute.xlu0 0
        %659 = vperm.xlu0 %658, %v569
        %v660 = vpop.permute.xlu0 %659
        %663 = vset.pattern.permute.xlu0 0
        %664 = vperm.xlu0 %663, %v571
        %v665 = vpop.permute.xlu0 %664
        %668 = vset.pattern.permute.xlu0 0
        %669 = vperm.xlu0 %668, %v573
        %v670 = vpop.permute.xlu0 %669
        %673 = vset.pattern.permute.xlu0 0
        %674 = vperm.xlu0 %673, %v575
        %v675 = vpop.permute.xlu0 %674
        %678 = vset.pattern.permute.xlu0 0
        %679 = vperm.xlu0 %678, %v577
        %v680 = vpop.permute.xlu0 %679
        %v682 = vmul.f32 %v605, %v586
        %v683 = vmul.f32 %v610, %v587
        %v684 = vmul.f32 %v615, %v588
        %v685 = vmul.f32 %v620, %v589
        %v686 = vmul.f32 %v625, %v590
        %v687 = vmul.f32 %v630, %v591
        %v688 = vmul.f32 %v635, %v592
        %v689 = vmul.f32 %v640, %v593
        %v690 = vmul.f32 %v645, %v594
        %v691 = vmul.f32 %v650, %v595
        %v692 = vmul.f32 %v655, %v596
        %v693 = vmul.f32 %v660, %v597
        %v694 = vmul.f32 %v665, %v598
        %v695 = vmul.f32 %v670, %v599
        %v696 = vmul.f32 %v675, %v600
        %v697 = vmul.f32 %v680, %v601
        %v698 = vpack.c.bf16 %v683, %v682
        %v699 = vpack.c.bf16 %v685, %v684
        %v700 = vpack.c.bf16 %v687, %v686
        %v701 = vpack.c.bf16 %v689, %v688
        %v702 = vpack.c.bf16 %v691, %v690
        %v703 = vpack.c.bf16 %v693, %v692
        %v704 = vpack.c.bf16 %v695, %v694
        %v705 = vpack.c.bf16 %v697, %v696
        %v706 = vld [vmem:[#allocation3] sm:$0xff]
        %707 = vmatpush.bf16.msra.mxu0 %v705
        %708 = vmatpush.bf16.msra.mxu0 %v704
        %709 = vmatpush.bf16.msra.mxu0 %v703
        %710 = vmatpush.bf16.msra.mxu0 %v702
        %711 = vmatpush.bf16.msra.mxu0 %v701
        %712 = vmatpush.bf16.msra.mxu0 %v700
        %713 = vmatpush.bf16.msra.mxu0 %v699
        %714 = vmatpush.bf16.msra.mxu0 %v698
        %715 = vmatmul.bf16.gmra.mxu0 %v585
        %v716 = vpop.f32.mrf.mxu0
        %v717 = vadd.f32 0.0, %v716
        %v718 = vpop.f32.mrf.mxu0
        %719 = vdwg.mxu0
        %v720 = vadd.f32 %v706, %v717
        %721 = vst.msk [vmem:[#allocation3] sm:$0xff] %vm312, %v720
        %v722 = vld [vmem:[#allocation2] sm:$0xff]
        %v723 = vpack.c.bf16 %v549, %v547
        %v724 = vpack.c.bf16 %v553, %v551
        %v725 = vpack.c.bf16 %v557, %v555
        %v726 = vpack.c.bf16 %v561, %v559
        %v727 = vpack.c.bf16 %v565, %v563
        %v728 = vpack.c.bf16 %v569, %v567
        %v729 = vpack.c.bf16 %v573, %v571
        %v730 = vpack.c.bf16 %v577, %v575
        %731 = vmatpush.bf16.msra.mxu0 %v730
        %732 = vmatpush.bf16.msra.mxu0 %v729
        %733 = vmatpush.bf16.msra.mxu0 %v728
        %734 = vmatpush.bf16.msra.mxu0 %v727
        %735 = vmatpush.bf16.msra.mxu0 %v726
        %736 = vmatpush.bf16.msra.mxu0 %v725
        %737 = vmatpush.bf16.msra.mxu0 %v724
        %738 = vmatpush.bf16.msra.mxu0 %v723
        %739 = vmatmul.bf16.gmra.mxu0 %v585
        %v740 = vpop.f32.mrf.mxu0
        %v741 = vadd.f32 0.0, %v740
        %v742 = vpop.f32.mrf.mxu0
        %743 = vdwg.mxu0
        %v744 = vadd.f32 %v722, %v741
        %745 = vst.msk [vmem:[#allocation2] sm:$0xff] %vm520, %v744
        %p746 = scmp.eq.s32.totalorder %s17, 2
        // Predicated region
        $region45: #{tpu_custom_call.1} parent=39 // pred_check
          %p747 = pneg %p746
        $region46: #{tpu_custom_call.1} parent=39 // pred_check_branch
          %749 = sbr.rel (%p747) target = $region48
        $region47: #{tpu_custom_call.1} parent=39 // pred_region
          %v750 = vld [vmem:[#allocation2] sm:$0xff]
          %vm751 = vcmp.gt.f32.partialorder %v750, 0.0
          %v752 = vrcp.pop %v750
          %v753 = vmul.f32 %v750, %v752
          %v754 = vsub.f32 1.0, %v753
          %v755 = vmul.f32 %v752, %v754
          %v756 = vadd.f32 %v752, %v755
          %vm757 = vweird.f32 %v750
          %vm758 = vweird.f32 %v752
          %vm759 = vmor %vm757, %vm758
          %v760 = vsel %vm759, %v752, %v756
          %v761 = vand.u32 2147483647, %v750
          %vm762 = vcmp.eq.f32.partialorder %v761, 8.507059e+37
          %v763 = vand.u32 %v750, 2147483648
          %v764 = vor.u32 1.1754944e-38, %v763
          %v765 = vsel %vm762, %v764, %v760
          %v766 = vsel %vm751, %v765, 0.0
          %v767 = vld [vmem:[#allocation3] sm:$0xff]
          %769 = vset.pattern.permute.xlu0 0
          %770 = vperm.xlu0 %769, %v766
          %v771 = vpop.permute.xlu0 %770
          %v773 = vmul.f32 %v767, %v771
          %774 = vst.msk [vmem:[#allocation3] sm:$0xff] %vm312, %v773
        $region48: #{tpu_custom_call.1} parent=39 // pred_fallthru
          _
        // Predicated region
        $region49: #{tpu_custom_call.1} parent=39 // pred_check
          %p775 = pneg %p145
        $region50: #{tpu_custom_call.1} parent=39 // pred_check_branch
          %777 = sbr.rel (%p775) target = $region52
        $region51: #{tpu_custom_call.1} parent=39 // pred_region
          %779 = vsyncadd [#allocation4], 0
          %s781 = sshll.u32 [#allocation3], 4
          %s782 = int_to_ptr.vmem [resolvable:$true] %s781
          %s783 = sshll.u32 %s5, 4
          %s784 = int_to_ptr.hbm [resolvable:$true] %s783
          %786 = dma.vmem_to_hbm [thread:$0]  %s782, 128, %s784, [#allocation4]
        $region52: #{tpu_custom_call.1} parent=39 // pred_fallthru
          _
        // Predicated region
        $region53: #{tpu_custom_call.1} parent=39 // pred_check
          %p787 = pneg %p145
        $region54: #{tpu_custom_call.1} parent=39 // pred_check_branch
          %789 = sbr.rel (%p787) target = $region56
        $region55: #{tpu_custom_call.1} parent=39 // pred_region
          %791 = dma.done [#allocation4], 128
        $region56: #{tpu_custom_call.1} parent=39 // pred_fallthru
          _
      $region40: #{tpu_custom_call.1} parent=5 // pred_fallthru
        _
      %p792 = scmp.le.s32.totalorder 2, %s12
      // Predicated region
      $region57: #{tpu_custom_call.1} parent=5 // pred_check
        %p793 = pneg %p792
      $region58: #{tpu_custom_call.1} parent=5 // pred_check_branch
        %795 = sbr.rel (%p793) target = $region60
      $region59: #{tpu_custom_call.1} parent=5 // pred_region
        %s796 = ssub.s32 %s12, 2
      $region60: #{tpu_custom_call.1} parent=5 // pred_fallthru
        _
    $region6: #{tpu_custom_call.1} parent=1 // loop_footer
      %s16 = sadd.s32 1, %s12
    $region7: #{tpu_custom_call.1} parent=1 // loop_footer_branch
      %11 = sbr.rel target = $region3
    $region8: #{tpu_custom_call.1} parent=1 // loop_exit
      _
    %797 = vsyncpa [#allocation4], 1
    %s798 = scalar_lea.sflag [#allocation4], 1
    %799 = vsyncpa %s798, 1

</llo_original>
